<compile_context>
chip_gen: v5e
topology: v5e:2x2
jax: 0.10.0
libtpu: 0.0.40
codegen_flags: <defaults>
</compile_context>

<pallas_src>
import functools

import jax
import jax.numpy as jnp
from jax.experimental import pallas as pl
from jax.experimental.pallas import tpu as pltpu

INPUT_DIM = 128
HID1 = 256
HID2 = 128
OUTPUT_DIM = 84
BN_EPS = 1e-5
MAX_BATCH_TILE = 4096                    # rows per grid step (amortizes ~0.35 us/step)
VMEM_LIMIT_BYTES = 48 * 1024 * 1024      # below v7x 64 MiB physical; fine on v5e/v6e


def _round_up(n, m):
    return ((n + m - 1) // m) * m


# ---------------------------------------------------------------------------
# shared in-kernel helpers
# ---------------------------------------------------------------------------
def _bn_scale_shift(s, ss, gamma, beta, b_true):
    """Fold training-mode BatchNorm1d batch stats into an affine scale/shift."""
    inv_b = 1.0 / b_true
    mean = s * inv_b
    var = jnp.maximum(ss * inv_b - mean * mean, 0.0)   # clamp: f32 cancellation guard
    inv_std = jax.lax.rsqrt(var + BN_EPS)
    scale = gamma * inv_std
    shift = beta - mean * scale
    return scale, shift


def _head(x_ref, w1_ref, b1_ref):
    """Linear(128->256) + ReLU with bf16 MXU inputs, f32 accumulation."""
    x = x_ref[...].astype(jnp.bfloat16)
    h1 = jnp.dot(x, w1_ref[...], preferred_element_type=jnp.float32)
    return jnp.maximum(h1 + b1_ref[...], 0.0)            # [tb, 256] f32


def _tail(h1, w2_ref, b2_ref, w3_ref, b3_ref, o_ref):
    """Linear(256->128) + ReLU + Linear(128->84), store to o_ref."""
    h2 = jnp.dot(h1.astype(jnp.bfloat16), w2_ref[...],
                 preferred_element_type=jnp.float32)
    h2 = jnp.maximum(h2 + b2_ref[...], 0.0)               # [tb, 128] f32
    out = jnp.dot(h2.astype(jnp.bfloat16), w3_ref[...],
                  preferred_element_type=jnp.float32)     # [tb, 84] f32
    o_ref[...] = (out + b3_ref[...]).astype(o_ref.dtype)


# ---------------------------------------------------------------------------
# Fused single-kernel path (whole batch fits one tile): 1 dispatch, x read once
# ---------------------------------------------------------------------------
def _fused_kernel(x_ref, w1_ref, b1_ref, gamma_ref, beta_ref,
                  w2_ref, b2_ref, w3_ref, b3_ref, o_ref, *, b_true):
    h1 = _head(x_ref, w1_ref, b1_ref)                     # [B, 256]
    s = jnp.sum(h1, axis=0, keepdims=True)
    ss = jnp.sum(h1 * h1, axis=0, keepdims=True)
    scale, shift = _bn_scale_shift(s, ss, gamma_ref[...], beta_ref[...], b_true)
    _tail(h1 * scale + shift, w2_ref, b2_ref, w3_ref, b3_ref, o_ref)


# ---------------------------------------------------------------------------
# Pass 1 (tiled path): accumulate sum / sum-of-squares of h1 over the batch
# ---------------------------------------------------------------------------
def _stats_kernel(x_ref, w1_ref, b1_ref, sum_ref, sumsq_ref, *, tb, b_true):
    i = pl.program_id(0)

    @pl.when(i == 0)
    def _init():
        sum_ref[...] = jnp.zeros_like(sum_ref)
        sumsq_ref[...] = jnp.zeros_like(sumsq_ref)

    h1 = _head(x_ref, w1_ref, b1_ref)                     # [tb, 256]
    # Mask rows of the ragged last tile out of the statistics (where, not *: no NaN leak).
    row = jax.lax.broadcasted_iota(jnp.int32, (tb, 1), 0) + i * tb
    h1 = jnp.where(row < b_true, h1, 0.0)

    sum_ref[...] += jnp.sum(h1, axis=0, keepdims=True)     # [1, 256]
    sumsq_ref[...] += jnp.sum(h1 * h1, axis=0, keepdims=True)


# ---------------------------------------------------------------------------
# Pass 2 (tiled path): full forward; BN scale/shift derived in-kernel from s/ss
# ---------------------------------------------------------------------------
def _fwd_kernel(x_ref, s_ref, ss_ref, w1_ref, b1_ref, gamma_ref, beta_ref,
                w2_ref, b2_ref, w3_ref, b3_ref, o_ref, *, b_true):
    scale, shift = _bn_scale_shift(s_ref[...], ss_ref[...],
                                   gamma_ref[...], beta_ref[...], b_true)
    h1 = _head(x_ref, w1_ref, b1_ref)
    _tail(h1 * scale + shift, w2_ref, b2_ref, w3_ref, b3_ref, o_ref)


# ---------------------------------------------------------------------------
# Wrapper
# ---------------------------------------------------------------------------
def decoder_forward(x, p, max_batch_tile=MAX_BATCH_TILE):
    B = x.shape[0]
    cp = pltpu.CompilerParams(vmem_limit_bytes=VMEM_LIMIT_BYTES)

    # ---- fast path: whole batch in one tile, everything fused in one kernel ----
    if B <= max_batch_tile:
        return pl.pallas_call(
            functools.partial(_fused_kernel, b_true=float(B)),
            out_shape=jax.ShapeDtypeStruct((B, OUTPUT_DIM), jnp.float32),
            compiler_params=cp,
        )(x, p["w1"], p["b1"], p["gamma"], p["beta"],
          p["w2"], p["b2"], p["w3"], p["b3"])

    # ---- tiled two-pass path (large batch) ----
    nb = pl.cdiv(B, max_batch_tile)
    TB = _round_up(pl.cdiv(B, nb), 16)      # bounded pad waste; bf16-friendly sublanes
    nb = pl.cdiv(B, TB)                     # ragged last tile handled by Pallas + mask

    tiled = lambda i: (i, 0)
    resident = lambda i: (0, 0)             # weights/biases/stats stay in VMEM

    s, ss = pl.pallas_call(
        functools.partial(_stats_kernel, tb=TB, b_true=B),
        out_shape=(jax.ShapeDtypeStruct((1, HID1), jnp.float32),
                   jax.ShapeDtypeStruct((1, HID1), jnp.float32)),
        grid=(nb,),
        in_specs=[pl.BlockSpec((TB, INPUT_DIM), tiled),
                  pl.BlockSpec((INPUT_DIM, HID1), resident),
                  pl.BlockSpec((1, HID1), resident)],
        out_specs=(pl.BlockSpec((1, HID1), resident),
                   pl.BlockSpec((1, HID1), resident)),
        compiler_params=pltpu.CompilerParams(
            dimension_semantics=("arbitrary",),
            vmem_limit_bytes=VMEM_LIMIT_BYTES),
    )(x, p["w1"], p["b1"])

    return pl.pallas_call(
        functools.partial(_fwd_kernel, b_true=float(B)),
        out_shape=jax.ShapeDtypeStruct((B, OUTPUT_DIM), jnp.float32),
        grid=(nb,),
        in_specs=[pl.BlockSpec((TB, INPUT_DIM), tiled),      # x (only pipelined input)
                  pl.BlockSpec((1, HID1), resident),          # s
                  pl.BlockSpec((1, HID1), resident),          # ss
                  pl.BlockSpec((INPUT_DIM, HID1), resident),  # w1
                  pl.BlockSpec((1, HID1), resident),          # b1
                  pl.BlockSpec((1, HID1), resident),          # gamma
                  pl.BlockSpec((1, HID1), resident),          # beta
                  pl.BlockSpec((HID1, HID2), resident),       # w2
                  pl.BlockSpec((1, HID2), resident),          # b2
                  pl.BlockSpec((HID2, OUTPUT_DIM), resident), # w3
                  pl.BlockSpec((1, OUTPUT_DIM), resident)],   # b3
        out_specs=pl.BlockSpec((TB, OUTPUT_DIM), tiled),
        compiler_params=pltpu.CompilerParams(
            dimension_semantics=("parallel",),                # megacore on v7x
            vmem_limit_bytes=VMEM_LIMIT_BYTES),
    )(x, s, ss, p["w1"], p["b1"], p["gamma"], p["beta"],
      p["w2"], p["b2"], p["w3"], p["b3"])


# ---------------------------------------------------------------------------
# Parameters
# ---------------------------------------------------------------------------
def init_params(key):
    ks = jax.random.split(key, 6)
    scale = 0.05
    return {
        "w1": scale * jax.random.normal(ks[0], (INPUT_DIM, HID1), jnp.float32),
        "b1": scale * jax.random.normal(ks[1], (1, HID1), jnp.float32),
        "gamma": jnp.ones((1, HID1), jnp.float32),
        "beta": jnp.zeros((1, HID1), jnp.float32),
        "w2": scale * jax.random.normal(ks[2], (HID1, HID2), jnp.float32),
        "b2": scale * jax.random.normal(ks[3], (1, HID2), jnp.float32),
        "w3": scale * jax.random.normal(ks[4], (HID2, OUTPUT_DIM), jnp.float32),
        "b3": scale * jax.random.normal(ks[5], (1, OUTPUT_DIM), jnp.float32),
    }


def prepare_params(p):
    """One-time weight prep (hoisted out of the jitted forward): bf16 matmul weights."""
    return {
        "w1": p["w1"].astype(jnp.bfloat16),
        "b1": p["b1"],
        "gamma": p["gamma"],
        "beta": p["beta"],
        "w2": p["w2"].astype(jnp.bfloat16),
        "b2": p["b2"],
        "w3": p["w3"].astype(jnp.bfloat16),
        "b3": p["b3"],
    }


def reference_forward(x, p):
    # Same mixed precision as the kernel (bf16 matmul inputs, f32 accumulation & BN math).
    h1 = jnp.dot(x.astype(jnp.bfloat16), p["w1"].astype(jnp.bfloat16),
                 preferred_element_type=jnp.float32) + p["b1"]
    h1 = jnp.maximum(h1, 0.0)
    mean = jnp.mean(h1, axis=0, keepdims=True)
    var = jnp.maximum(jnp.mean(h1 * h1, axis=0, keepdims=True) - mean * mean, 0.0)
    h1 = (h1 - mean) * jax.lax.rsqrt(var + BN_EPS) * p["gamma"] + p["beta"]
    h2 = jnp.dot(h1.astype(jnp.bfloat16), p["w2"].astype(jnp.bfloat16),
                 preferred_element_type=jnp.float32) + p["b2"]
    h2 = jnp.maximum(h2, 0.0)
    return jnp.dot(h2.astype(jnp.bfloat16), p["w3"].astype(jnp.bfloat16),
                   preferred_element_type=jnp.float32) + p["b3"]


if __name__ == "__main__":
    key = jax.random.PRNGKey(0)
    k_x, k_x2, k_p = jax.random.split(key, 3)
    params = init_params(k_p)
    prepped = prepare_params(params)   # one-time bf16 weight prep, outside jit

    fwd = jax.jit(decoder_forward, static_argnames=("max_batch_tile",))

    # Small batch -> fused single-kernel path.
    B = 8
    x = jax.random.normal(k_x, (B, INPUT_DIM), jnp.float32)
    out = jax.block_until_ready(fwd(x, prepped))
    ref = reference_forward(x, params)
    assert out.shape == (B, OUTPUT_DIM), out.shape
    err = float(jnp.max(jnp.abs(out - ref)))
    assert jnp.allclose(out, ref, atol=5e-3, rtol=5e-3), err

    # Also exercise the tiled two-pass path (ragged last tile) with a small tile override.
    B2 = 40
    x2 = jax.random.normal(k_x2, (B2, INPUT_DIM), jnp.float32)
    out2 = jax.block_until_ready(fwd(x2, prepped, max_batch_tile=16))
    ref2 = reference_forward(x2, params)
    assert out2.shape == (B2, OUTPUT_DIM), out2.shape
    err2 = float(jnp.max(jnp.abs(out2 - ref2)))
    assert jnp.allclose(out2, ref2, atol=5e-3, rtol=5e-3), err2

    print("KERNEL_OK")
</pallas_src>

<mosaic_0001>
module attributes {stable_mosaic.version = 11 : i64} {
  func.func @_fused_kernel(%arg0: memref<8x128xf32, #tpu.memory_space<vmem>>, %arg1: memref<128x256xbf16, #tpu.memory_space<vmem>>, %arg2: memref<1x256xf32, #tpu.memory_space<vmem>>, %arg3: memref<1x256xf32, #tpu.memory_space<vmem>>, %arg4: memref<1x256xf32, #tpu.memory_space<vmem>>, %arg5: memref<256x128xbf16, #tpu.memory_space<vmem>>, %arg6: memref<1x128xf32, #tpu.memory_space<vmem>>, %arg7: memref<128x84xbf16, #tpu.memory_space<vmem>>, %arg8: memref<1x84xf32, #tpu.memory_space<vmem>>, %arg9: memref<8x84xf32, #tpu.memory_space<vmem>>) attributes {dimension_semantics = [], scalar_prefetch = 0 : i64, scratch_operands = 0 : i64, tpu.core_type = #tpu.core_type<tc>} {
    %c0 = arith.constant 0 : index
    %c0_0 = arith.constant 0 : index
    %0 = vector.load %arg0[%c0, %c0_0] : memref<8x128xf32, #tpu.memory_space<vmem>>, vector<8x128xf32>
    %1 = arith.truncf %0 : vector<8x128xf32> to vector<8x128xbf16>
    %c0_1 = arith.constant 0 : index
    %c0_2 = arith.constant 0 : index
    %2 = vector.load %arg1[%c0_1, %c0_2] : memref<128x256xbf16, #tpu.memory_space<vmem>>, vector<128x256xbf16>
    %cst = arith.constant dense<0.000000e+00> : vector<8x256xf32>
    %3 = tpu.matmul %1, %2, %cst {dimension_numbers = #tpu.dot_dimension_numbers<[1], [0], [0], [1], [0, 0, 1, 1], [], []>} : vector<8x128xbf16>, vector<128x256xbf16>, vector<8x256xf32> -> vector<8x256xf32>
    %c0_3 = arith.constant 0 : index
    %c0_4 = arith.constant 0 : index
    %4 = vector.load %arg2[%c0_3, %c0_4] : memref<1x256xf32, #tpu.memory_space<vmem>>, vector<1x256xf32>
    %5 = vector.broadcast %4 : vector<1x256xf32> to vector<8x256xf32>
    %6 = arith.addf %3, %5 : vector<8x256xf32>
    %cst_5 = arith.constant 0.000000e+00 : f32
    %7 = vector.broadcast %cst_5 : f32 to vector<8x256xf32>
    %8 = arith.maximumf %6, %7 : vector<8x256xf32>
    %cst_6 = arith.constant dense<0.000000e+00> : vector<256xf32>
    %9 = vector.multi_reduction <add>, %8, %cst_6 [0] : vector<8x256xf32> to vector<256xf32>
    %10 = vector.shape_cast %9 : vector<256xf32> to vector<1x256xf32>
    %11 = arith.mulf %8, %8 : vector<8x256xf32>
    %cst_7 = arith.constant dense<0.000000e+00> : vector<256xf32>
    %12 = vector.multi_reduction <add>, %11, %cst_7 [0] : vector<8x256xf32> to vector<256xf32>
    %13 = vector.shape_cast %12 : vector<256xf32> to vector<1x256xf32>
    %c0_8 = arith.constant 0 : index
    %c0_9 = arith.constant 0 : index
    %14 = vector.load %arg3[%c0_8, %c0_9] : memref<1x256xf32, #tpu.memory_space<vmem>>, vector<1x256xf32>
    %c0_10 = arith.constant 0 : index
    %c0_11 = arith.constant 0 : index
    %15 = vector.load %arg4[%c0_10, %c0_11] : memref<1x256xf32, #tpu.memory_space<vmem>>, vector<1x256xf32>
    %cst_12 = arith.constant 1.250000e-01 : f32
    %16 = vector.broadcast %cst_12 : f32 to vector<1x256xf32>
    %17 = arith.mulf %10, %16 : vector<1x256xf32>
    %cst_13 = arith.constant 1.250000e-01 : f32
    %18 = vector.broadcast %cst_13 : f32 to vector<1x256xf32>
    %19 = arith.mulf %13, %18 : vector<1x256xf32>
    %20 = arith.mulf %17, %17 : vector<1x256xf32>
    %21 = arith.subf %19, %20 : vector<1x256xf32>
    %cst_14 = arith.constant 0.000000e+00 : f32
    %22 = vector.broadcast %cst_14 : f32 to vector<1x256xf32>
    %23 = arith.maximumf %21, %22 : vector<1x256xf32>
    %cst_15 = arith.constant 9.99999974E-6 : f32
    %24 = vector.broadcast %cst_15 : f32 to vector<1x256xf32>
    %25 = arith.addf %23, %24 : vector<1x256xf32>
    %26 = math.rsqrt %25 : vector<1x256xf32>
    %27 = arith.mulf %14, %26 : vector<1x256xf32>
    %28 = arith.mulf %17, %27 : vector<1x256xf32>
    %29 = arith.subf %15, %28 : vector<1x256xf32>
    %30 = vector.broadcast %27 : vector<1x256xf32> to vector<8x256xf32>
    %31 = arith.mulf %8, %30 : vector<8x256xf32>
    %32 = vector.broadcast %29 : vector<1x256xf32> to vector<8x256xf32>
    %33 = arith.addf %31, %32 : vector<8x256xf32>
    %34 = arith.truncf %33 : vector<8x256xf32> to vector<8x256xbf16>
    %c0_16 = arith.constant 0 : index
    %c0_17 = arith.constant 0 : index
    %35 = vector.load %arg5[%c0_16, %c0_17] : memref<256x128xbf16, #tpu.memory_space<vmem>>, vector<256x128xbf16>
    %cst_18 = arith.constant dense<0.000000e+00> : vector<8x128xf32>
    %36 = tpu.matmul %34, %35, %cst_18 {dimension_numbers = #tpu.dot_dimension_numbers<[1], [0], [0], [1], [0, 0, 1, 1], [], []>} : vector<8x256xbf16>, vector<256x128xbf16>, vector<8x128xf32> -> vector<8x128xf32>
    %c0_19 = arith.constant 0 : index
    %c0_20 = arith.constant 0 : index
    %37 = vector.load %arg6[%c0_19, %c0_20] : memref<1x128xf32, #tpu.memory_space<vmem>>, vector<1x128xf32>
    %38 = vector.broadcast %37 : vector<1x128xf32> to vector<8x128xf32>
    %39 = arith.addf %36, %38 : vector<8x128xf32>
    %cst_21 = arith.constant 0.000000e+00 : f32
    %40 = vector.broadcast %cst_21 : f32 to vector<8x128xf32>
    %41 = arith.maximumf %39, %40 : vector<8x128xf32>
    %42 = arith.truncf %41 : vector<8x128xf32> to vector<8x128xbf16>
    %c0_22 = arith.constant 0 : index
    %c0_23 = arith.constant 0 : index
    %43 = vector.load %arg7[%c0_22, %c0_23] : memref<128x84xbf16, #tpu.memory_space<vmem>>, vector<128x84xbf16>
    %cst_24 = arith.constant dense<0.000000e+00> : vector<8x84xf32>
    %44 = tpu.matmul %42, %43, %cst_24 {dimension_numbers = #tpu.dot_dimension_numbers<[1], [0], [0], [1], [0, 0, 1, 1], [], []>} : vector<8x128xbf16>, vector<128x84xbf16>, vector<8x84xf32> -> vector<8x84xf32>
    %c0_25 = arith.constant 0 : index
    %c0_26 = arith.constant 0 : index
    %45 = vector.load %arg8[%c0_25, %c0_26] : memref<1x84xf32, #tpu.memory_space<vmem>>, vector<1x84xf32>
    %46 = vector.broadcast %45 : vector<1x84xf32> to vector<8x84xf32>
    %47 = arith.addf %44, %46 : vector<8x84xf32>
    %c0_27 = arith.constant 0 : index
    %c0_28 = arith.constant 0 : index
    %48 = vector.load %arg9[%c0_27, %c0_28] : memref<8x84xf32, #tpu.memory_space<vmem>>, vector<8x84xf32>
    tpu.vector_store %arg9[%c0_27, %c0_28], %47 {strides = array<i32>} : memref<8x84xf32, #tpu.memory_space<vmem>>, vector<8x84xf32>,
    return
  }
}

</mosaic_0001>

<llo_original>
// kernel: decoder_forward.1
$region0: #{decoder_forward.1}
  #allocation0 [shape = 'u32[]', space=smem, size = 0x4, offset = 0x4, fixed_abs, tag = 'smem constant byte address 0x4 - core index']
  #allocation1 [shape = 'u32[72,128]{1,0:T(1,128)}', space=vmem, size = 0x9000, scoped, tag = 'internal scratch']
  %s0 = inlined_call_operand.vmem [shape: f32[8,128], index: 0, kind: input, shape index: {}]
  %s1 = inlined_call_operand.hbm [shape: bf16[128,256], index: 1, kind: input, shape index: {}]
  %s2 = inlined_call_operand.vmem [shape: f32[1,256], index: 2, kind: input, shape index: {}]
  %s3 = inlined_call_operand.vmem [shape: f32[1,256], index: 3, kind: input, shape index: {}]
  %s4 = inlined_call_operand.vmem [shape: f32[1,256], index: 4, kind: input, shape index: {}]
  %s5 = inlined_call_operand.hbm [shape: bf16[256,128], index: 5, kind: input, shape index: {}]
  %s6 = inlined_call_operand.vmem [shape: f32[1,128], index: 6, kind: input, shape index: {}]
  %s7 = inlined_call_operand.vmem [shape: bf16[128,84], index: 7, kind: input, shape index: {}]
  %s8 = inlined_call_operand.vmem [shape: f32[1,84], index: 8, kind: input, shape index: {}]
  %s9 = inlined_call_operand.hbm [shape: f32[8,84], index: 9, kind: output, shape index: {}]
  %s10 = sld [smem:[#allocation0]]
  $region54: #{decoder_forward.1} parent=0
    _
  %s12 = ssub.s32 1, %s10
  %s13 = scalar_select 0, %s12, %s10
  $region1: #{decoder_forward.1} parent=0
    #allocation2 [shape = 'u8[65536]{0}', space=vmem, size = 0x10000, scoped, tag = 'input window, operand 1, single buffered']
    #allocation3 [shape = 's32[1]{0}', space=sflag, size = 0x4, scoped, tag = 'scoped memory for decoder_forward.1']
    #allocation4 [shape = 's32[1]{0}', space=sflag, size = 0x4, scoped, tag = 'scoped memory for decoder_forward.1']
    #allocation5 [shape = 'u8[65536]{0}', space=vmem, size = 0x10000, scoped, tag = 'input window, operand 5, single buffered']
    #allocation6 [shape = 's32[1]{0}', space=sflag, size = 0x4, scoped, tag = 'scoped memory for decoder_forward.1']
    #allocation7 [shape = 'u8[4096]{0}', space=vmem, size = 0x1000, scoped, tag = 'output window, operand 0, single buffered']
    %14 = vsyncpa [#allocation3], 0
    %15 = vsyncpa [#allocation6], 0
    %16 = vsyncpa [#allocation4], 0
    // Predicated region
    $region2: #{decoder_forward.1} parent=1 // pred_check
      _
    $region3: #{decoder_forward.1} parent=1 // pred_check_branch
      %18 = sbr.rel (0) target = $region5
    $region4: #{decoder_forward.1} parent=1 // pred_region
      _
    $region5: #{decoder_forward.1} parent=1 // pred_fallthru
      _
    // Predicated region
    $region6: #{decoder_forward.1} parent=1 // pred_check
      _
    $region7: #{decoder_forward.1} parent=1 // pred_check_branch
      %20 = sbr.rel (0) target = $region9
    $region8: #{decoder_forward.1} parent=1 // pred_region
      %22 = vsyncadd [#allocation3], 0
      %s23 = sshll.u32 %s1, 4
      %s24 = int_to_ptr.hbm [resolvable:$true] %s23
      %s25 = sshll.u32 [#allocation2], 4
      %s26 = int_to_ptr.vmem [resolvable:$true] %s25
      %31 = dma.hbm_to_vmem [thread:$0]  %s24, 2048, %s26, [#allocation3], 128, 128, 8
    $region9: #{decoder_forward.1} parent=1 // pred_fallthru
      _
    // Predicated region
    $region10: #{decoder_forward.1} parent=1 // pred_check
      _
    $region11: #{decoder_forward.1} parent=1 // pred_check_branch
      %33 = sbr.rel (0) target = $region13
    $region12: #{decoder_forward.1} parent=1 // pred_region
      _
    $region13: #{decoder_forward.1} parent=1 // pred_fallthru
      _
    // Predicated region
    $region14: #{decoder_forward.1} parent=1 // pred_check
      _
    $region15: #{decoder_forward.1} parent=1 // pred_check_branch
      %35 = sbr.rel (0) target = $region17
    $region16: #{decoder_forward.1} parent=1 // pred_region
      _
    $region17: #{decoder_forward.1} parent=1 // pred_fallthru
      _
    // Predicated region
    $region18: #{decoder_forward.1} parent=1 // pred_check
      _
    $region19: #{decoder_forward.1} parent=1 // pred_check_branch
      %37 = sbr.rel (0) target = $region21
    $region20: #{decoder_forward.1} parent=1 // pred_region
      _
    $region21: #{decoder_forward.1} parent=1 // pred_fallthru
      _
    // Predicated region
    $region22: #{decoder_forward.1} parent=1 // pred_check
      _
    $region23: #{decoder_forward.1} parent=1 // pred_check_branch
      %39 = sbr.rel (0) target = $region25
    $region24: #{decoder_forward.1} parent=1 // pred_region
      %41 = vsyncadd [#allocation6], 0
      %s42 = sshll.u32 %s5, 4
      %s43 = int_to_ptr.hbm [resolvable:$true] %s42
      %s44 = sshll.u32 [#allocation5], 4
      %s45 = int_to_ptr.vmem [resolvable:$true] %s44
      %50 = dma.hbm_to_vmem [thread:$0]  %s43, 2048, %s45, [#allocation6], 64, 64, 4
    $region25: #{decoder_forward.1} parent=1 // pred_fallthru
      _
    // Predicated region
    $region26: #{decoder_forward.1} parent=1 // pred_check
      _
    $region27: #{decoder_forward.1} parent=1 // pred_check_branch
      %52 = sbr.rel (0) target = $region29
    $region28: #{decoder_forward.1} parent=1 // pred_region
      _
    $region29: #{decoder_forward.1} parent=1 // pred_fallthru
      _
    // Predicated region
    $region30: #{decoder_forward.1} parent=1 // pred_check
      _
    $region31: #{decoder_forward.1} parent=1 // pred_check_branch
      %54 = sbr.rel (0) target = $region33
    $region32: #{decoder_forward.1} parent=1 // pred_region
      _
    $region33: #{decoder_forward.1} parent=1 // pred_fallthru
      _
    // Predicated region
    $region34: #{decoder_forward.1} parent=1 // pred_check
      _
    $region35: #{decoder_forward.1} parent=1 // pred_check_branch
      %56 = sbr.rel (0) target = $region37
    $region36: #{decoder_forward.1} parent=1 // pred_region
      _
    $region37: #{decoder_forward.1} parent=1 // pred_fallthru
      _
    // Predicated region
    $region38: #{decoder_forward.1} parent=1 // pred_check
      _
    $region39: #{decoder_forward.1} parent=1 // pred_check_branch
      %58 = sbr.rel (0) target = $region41
    $region40: #{decoder_forward.1} parent=1 // pred_region
      %60 = dma.done [#allocation3], 2048
    $region41: #{decoder_forward.1} parent=1 // pred_fallthru
      _
    // Predicated region
    $region42: #{decoder_forward.1} parent=1 // pred_check
      _
    $region43: #{decoder_forward.1} parent=1 // pred_check_branch
      %62 = sbr.rel (0) target = $region45
    $region44: #{decoder_forward.1} parent=1 // pred_region
      %64 = dma.done [#allocation6], 2048
    $region45: #{decoder_forward.1} parent=1 // pred_fallthru
      _
    %v65 = vld [vmem:[%s0] sm:$0xff]
    %v66 = vpack.c.bf16 %v65, %v65
    %v67 = vld [vmem:[#allocation2] sm:$0xff]
    %v68 = vld [vmem:[#allocation2 + $0x8] sm:$0xff]
    %v69 = vld [vmem:[#allocation2 + $0x10] sm:$0xff]
    %v70 = vld [vmem:[#allocation2 + $0x18] sm:$0xff]
    %v71 = vld [vmem:[#allocation2 + $0x20] sm:$0xff]
    %v72 = vld [vmem:[#allocation2 + $0x28] sm:$0xff]
    %v73 = vld [vmem:[#allocation2 + $0x30] sm:$0xff]
    %v74 = vld [vmem:[#allocation2 + $0x38] sm:$0xff]
    %v75 = vld [vmem:[#allocation2 + $0x40] sm:$0xff]
    %v76 = vld [vmem:[#allocation2 + $0x48] sm:$0xff]
    %v77 = vld [vmem:[#allocation2 + $0x50] sm:$0xff]
    %v78 = vld [vmem:[#allocation2 + $0x58] sm:$0xff]
    %v79 = vld [vmem:[#allocation2 + $0x60] sm:$0xff]
    %v80 = vld [vmem:[#allocation2 + $0x68] sm:$0xff]
    %v81 = vld [vmem:[#allocation2 + $0x70] sm:$0xff]
    %v82 = vld [vmem:[#allocation2 + $0x78] sm:$0xff]
    %v83 = vld [vmem:[%s2] sm:$0x3]
    %v85 = vperm.slane %v83, 0
    %v86 = vperm.slane %v83, 1
    %v105 = vunpack.c.l.b16 %v67
    %v106 = vunpack.c.h.b16 %v67
    %v107 = vunpack.c.l.b16 %v68
    %v108 = vunpack.c.h.b16 %v68
    %v109 = vunpack.c.l.b16 %v69
    %v110 = vunpack.c.h.b16 %v69
    %v111 = vunpack.c.l.b16 %v70
    %v112 = vunpack.c.h.b16 %v70
    %v113 = vunpack.c.l.b16 %v71
    %v114 = vunpack.c.h.b16 %v71
    %v115 = vunpack.c.l.b16 %v72
    %v116 = vunpack.c.h.b16 %v72
    %v117 = vunpack.c.l.b16 %v73
    %v118 = vunpack.c.h.b16 %v73
    %v119 = vunpack.c.l.b16 %v74
    %v120 = vunpack.c.h.b16 %v74
    %v121 = vunpack.c.l.b16 %v75
    %v122 = vunpack.c.h.b16 %v75
    %v123 = vunpack.c.l.b16 %v76
    %v124 = vunpack.c.h.b16 %v76
    %v125 = vunpack.c.l.b16 %v77
    %v126 = vunpack.c.h.b16 %v77
    %v127 = vunpack.c.l.b16 %v78
    %v128 = vunpack.c.h.b16 %v78
    %v129 = vunpack.c.l.b16 %v79
    %v130 = vunpack.c.h.b16 %v79
    %v131 = vunpack.c.l.b16 %v80
    %v132 = vunpack.c.h.b16 %v80
    %v133 = vunpack.c.l.b16 %v81
    %v134 = vunpack.c.h.b16 %v81
    %v135 = vunpack.c.l.b16 %v82
    %v136 = vunpack.c.h.b16 %v82
    %v137 = vpack.c.b16 %v107, %v105
    %v138 = vpack.c.b16 %v108, %v106
    %v139 = vpack.c.b16 %v111, %v109
    %v140 = vpack.c.b16 %v112, %v110
    %v141 = vpack.c.b16 %v115, %v113
    %v142 = vpack.c.b16 %v116, %v114
    %v143 = vpack.c.b16 %v119, %v117
    %v144 = vpack.c.b16 %v120, %v118
    %v145 = vpack.c.b16 %v123, %v121
    %v146 = vpack.c.b16 %v124, %v122
    %v147 = vpack.c.b16 %v127, %v125
    %v148 = vpack.c.b16 %v128, %v126
    %v149 = vpack.c.b16 %v131, %v129
    %v150 = vpack.c.b16 %v132, %v130
    %v151 = vpack.c.b16 %v135, %v133
    %v152 = vpack.c.b16 %v136, %v134
    %169 = vmatpush.bf16.msra.mxu0 %v151
    %170 = vmatpush.bf16.msra.mxu0 %v149
    %171 = vmatpush.bf16.msra.mxu0 %v147
    %172 = vmatpush.bf16.msra.mxu0 %v145
    %173 = vmatpush.bf16.msra.mxu0 %v143
    %174 = vmatpush.bf16.msra.mxu0 %v141
    %175 = vmatpush.bf16.msra.mxu0 %v139
    %176 = vmatpush.bf16.msra.mxu0 %v137
    %177 = vmatmul.bf16.gmra.mxu0 %v66
    %v178 = vpop.f32.mrf.mxu0
    %v179 = vadd.f32 %v85, %v178
    %v180 = vpop.f32.mrf.mxu0
    %181 = vdwg.mxu0
    %182 = vmatpush.bf16.msra.mxu0 %v152
    %183 = vmatpush.bf16.msra.mxu0 %v150
    %184 = vmatpush.bf16.msra.mxu0 %v148
    %185 = vmatpush.bf16.msra.mxu0 %v146
    %186 = vmatpush.bf16.msra.mxu0 %v144
    %187 = vmatpush.bf16.msra.mxu0 %v142
    %188 = vmatpush.bf16.msra.mxu0 %v140
    %189 = vmatpush.bf16.msra.mxu0 %v138
    %190 = vmatmul.bf16.gmra.mxu0 %v66
    %v191 = vpop.f32.mrf.mxu0
    %v192 = vadd.f32 %v86, %v191
    %v193 = vpop.f32.mrf.mxu0
    %194 = vdwg.mxu0
    %v195 = vmax.f32 %v179, 0.0
    %v196 = vmax.f32 %v192, 0.0
    %v197 = vrot.slane %v195, 4
    %v198 = vadd.f32 %v195, %v197
    %v199 = vrot.slane %v198, 2
    %v200 = vadd.f32 %v198, %v199
    %v201 = vrot.slane %v200, 1
    %v202 = vadd.f32 %v200, %v201
    %v203 = vrot.slane %v196, 4
    %v204 = vadd.f32 %v196, %v203
    %v205 = vrot.slane %v204, 2
    %v206 = vadd.f32 %v204, %v205
    %v207 = vrot.slane %v206, 1
    %v208 = vadd.f32 %v206, %v207
    %v209 = vmul.f32 %v195, %v195
    %v210 = vmul.f32 %v196, %v196
    %v211 = vrot.slane %v209, 4
    %v212 = vadd.f32 %v209, %v211
    %v213 = vrot.slane %v212, 2
    %v214 = vadd.f32 %v212, %v213
    %v215 = vrot.slane %v214, 1
    %v216 = vadd.f32 %v214, %v215
    %v217 = vrot.slane %v210, 4
    %v218 = vadd.f32 %v210, %v217
    %v219 = vrot.slane %v218, 2
    %v220 = vadd.f32 %v218, %v219
    %v221 = vrot.slane %v220, 1
    %v222 = vadd.f32 %v220, %v221
    %v223 = vld [vmem:[%s3] sm:$0x3]
    %v224 = vld [vmem:[%s4] sm:$0x3]
    %v225 = vmul.f32 %v202, 0.125
    %v226 = vmul.f32 %v208, 0.125
    %v227 = vmul.f32 %v216, 0.125
    %v228 = vmul.f32 %v222, 0.125
    %v229 = vmul.f32 %v225, %v225
    %v230 = vmul.f32 %v226, %v226
    %v231 = vsub.f32 %v227, %v229
    %v232 = vsub.f32 %v228, %v230
    %v233 = vmax.f32 %v231, 0.0
    %v234 = vmax.f32 %v232, 0.0
    %v235 = vadd.f32 %v233, 1e-05
    %v236 = vadd.f32 %v234, 1e-05
    %v237 = vrsqrt.pop %v235
    %v238 = vmul.f32 %v237, %v235
    %v239 = vmul.f32 %v238, %v237
    %v240 = vmul.f32 0.5, %v239
    %v241 = vsub.f32 1.5, %v240
    %v242 = vmul.f32 %v237, %v241
    %vm243 = vweird.f32 %v235
    %vm244 = vweird.f32 %v237
    %vm245 = vmor %vm243, %vm244
    %v246 = vsel %vm245, %v237, %v242
    %v247 = vrsqrt.pop %v236
    %v248 = vmul.f32 %v247, %v236
    %v249 = vmul.f32 %v248, %v247
    %v250 = vmul.f32 0.5, %v249
    %v251 = vsub.f32 1.5, %v250
    %v252 = vmul.f32 %v247, %v251
    %vm253 = vweird.f32 %v236
    %vm254 = vweird.f32 %v247
    %vm255 = vmor %vm253, %vm254
    %v256 = vsel %vm255, %v247, %v252
    %v259 = vrot.slane %v256, 7
    %vm260 = vcmask 1040384
    %v261 = vsel %vm260, %v246, %v259
    %v263 = vmul.f32 %v223, %v261
    %v265 = vperm.slane %v263, 0
    %v266 = vperm.slane %v263, 1
    %v269 = vmul.f32 %v225, %v265
    %v270 = vmul.f32 %v226, %v266
    %v273 = vrot.slane %v270, 7
    %v274 = vsel %vm260, %v269, %v273
    %v276 = vsub.f32 %v224, %v274
    %v277 = vmul.f32 %v195, %v265
    %v278 = vmul.f32 %v196, %v266
    %v280 = vperm.slane %v276, 0
    %v281 = vperm.slane %v276, 1
    %v284 = vadd.f32 %v277, %v280
    %v285 = vadd.f32 %v278, %v281
    %v286 = vpack.c.bf16 %v284, %v284
    %v287 = vpack.c.bf16 %v285, %v285
    %v288 = vld [vmem:[#allocation5] sm:$0xf]
    %v289 = vld [vmem:[#allocation5 + $0x4] sm:$0xf]
    %v290 = vld [vmem:[#allocation5 + $0x8] sm:$0xf]
    %v291 = vld [vmem:[#allocation5 + $0xc] sm:$0xf]
    %v292 = vld [vmem:[#allocation5 + $0x10] sm:$0xf]
    %v293 = vld [vmem:[#allocation5 + $0x14] sm:$0xf]
    %v294 = vld [vmem:[#allocation5 + $0x18] sm:$0xf]
    %v295 = vld [vmem:[#allocation5 + $0x1c] sm:$0xf]
    %v296 = vld [vmem:[#allocation5 + $0x20] sm:$0xf]
    %v297 = vld [vmem:[#allocation5 + $0x24] sm:$0xf]
    %v298 = vld [vmem:[#allocation5 + $0x28] sm:$0xf]
    %v299 = vld [vmem:[#allocation5 + $0x2c] sm:$0xf]
    %v300 = vld [vmem:[#allocation5 + $0x30] sm:$0xf]
    %v301 = vld [vmem:[#allocation5 + $0x34] sm:$0xf]
    %v302 = vld [vmem:[#allocation5 + $0x38] sm:$0xf]
    %v303 = vld [vmem:[#allocation5 + $0x3c] sm:$0xf]
    %v304 = vld [vmem:[#allocation5 + $0x40] sm:$0xf]
    %v305 = vld [vmem:[#allocation5 + $0x44] sm:$0xf]
    %v306 = vld [vmem:[#allocation5 + $0x48] sm:$0xf]
    %v307 = vld [vmem:[#allocation5 + $0x4c] sm:$0xf]
    %v308 = vld [vmem:[#allocation5 + $0x50] sm:$0xf]
    %v309 = vld [vmem:[#allocation5 + $0x54] sm:$0xf]
    %v310 = vld [vmem:[#allocation5 + $0x58] sm:$0xf]
    %v311 = vld [vmem:[#allocation5 + $0x5c] sm:$0xf]
    %v312 = vld [vmem:[#allocation5 + $0x60] sm:$0xf]
    %v313 = vld [vmem:[#allocation5 + $0x64] sm:$0xf]
    %v314 = vld [vmem:[#allocation5 + $0x68] sm:$0xf]
    %v315 = vld [vmem:[#allocation5 + $0x6c] sm:$0xf]
    %v316 = vld [vmem:[#allocation5 + $0x70] sm:$0xf]
    %v317 = vld [vmem:[#allocation5 + $0x74] sm:$0xf]
    %v318 = vld [vmem:[#allocation5 + $0x78] sm:$0xf]
    %v319 = vld [vmem:[#allocation5 + $0x7c] sm:$0xf]
    %v320 = vld [vmem:[%s6] sm:$0x1]
    %v322 = vperm.slane %v320, 0
    %v356 = vunpack.c.l.b16 %v288
    %v357 = vunpack.c.l.b16 %v289
    %v358 = vunpack.c.l.b16 %v290
    %v359 = vunpack.c.l.b16 %v291
    %v360 = vunpack.c.l.b16 %v292
    %v361 = vunpack.c.l.b16 %v293
    %v362 = vunpack.c.l.b16 %v294
    %v363 = vunpack.c.l.b16 %v295
    %v364 = vunpack.c.l.b16 %v296
    %v365 = vunpack.c.l.b16 %v297
    %v366 = vunpack.c.l.b16 %v298
    %v367 = vunpack.c.l.b16 %v299
    %v368 = vunpack.c.l.b16 %v300
    %v369 = vunpack.c.l.b16 %v301
    %v370 = vunpack.c.l.b16 %v302
    %v371 = vunpack.c.l.b16 %v303
    %v372 = vunpack.c.l.b16 %v304
    %v373 = vunpack.c.l.b16 %v305
    %v374 = vunpack.c.l.b16 %v306
    %v375 = vunpack.c.l.b16 %v307
    %v376 = vunpack.c.l.b16 %v308
    %v377 = vunpack.c.l.b16 %v309
    %v378 = vunpack.c.l.b16 %v310
    %v379 = vunpack.c.l.b16 %v311
    %v380 = vunpack.c.l.b16 %v312
    %v381 = vunpack.c.l.b16 %v313
    %v382 = vunpack.c.l.b16 %v314
    %v383 = vunpack.c.l.b16 %v315
    %v384 = vunpack.c.l.b16 %v316
    %v385 = vunpack.c.l.b16 %v317
    %v386 = vunpack.c.l.b16 %v318
    %v387 = vunpack.c.l.b16 %v319
    %v388 = vpack.c.b16 %v357, %v356
    %v389 = vpack.c.b16 %v359, %v358
    %v390 = vpack.c.b16 %v361, %v360
    %v391 = vpack.c.b16 %v363, %v362
    %v392 = vpack.c.b16 %v365, %v364
    %v393 = vpack.c.b16 %v367, %v366
    %v394 = vpack.c.b16 %v369, %v368
    %v395 = vpack.c.b16 %v371, %v370
    %v396 = vpack.c.b16 %v373, %v372
    %v397 = vpack.c.b16 %v375, %v374
    %v398 = vpack.c.b16 %v377, %v376
    %v399 = vpack.c.b16 %v379, %v378
    %v400 = vpack.c.b16 %v381, %v380
    %v401 = vpack.c.b16 %v383, %v382
    %v402 = vpack.c.b16 %v385, %v384
    %v403 = vpack.c.b16 %v387, %v386
    %420 = vmatpush.bf16.msra.mxu0 %v395
    %421 = vmatpush.bf16.msra.mxu0 %v394
    %422 = vmatpush.bf16.msra.mxu0 %v393
    %423 = vmatpush.bf16.msra.mxu0 %v392
    %424 = vmatpush.bf16.msra.mxu0 %v391
    %425 = vmatpush.bf16.msra.mxu0 %v390
    %426 = vmatpush.bf16.msra.mxu0 %v389
    %427 = vmatpush.bf16.msra.mxu0 %v388
    %428 = vmatmul.bf16.gmra.mxu0 %v286
    %v429 = vpop.f32.mrf.mxu0
    %v430 = vadd.f32 %v322, %v429
    %v431 = vpop.f32.mrf.mxu0
    %432 = vdwg.mxu0
    %433 = vmatpush.bf16.msra.mxu0 %v403
    %434 = vmatpush.bf16.msra.mxu0 %v402
    %435 = vmatpush.bf16.msra.mxu0 %v401
    %436 = vmatpush.bf16.msra.mxu0 %v400
    %437 = vmatpush.bf16.msra.mxu0 %v399
    %438 = vmatpush.bf16.msra.mxu0 %v398
    %439 = vmatpush.bf16.msra.mxu0 %v397
    %440 = vmatpush.bf16.msra.mxu0 %v396
    %441 = vmatmul.bf16.gmra.mxu0 %v287
    %v442 = vpop.f32.mrf.mxu0
    %v443 = vadd.f32 %v430, %v442
    %v444 = vpop.f32.mrf.mxu0
    %445 = vdwg.mxu0
    %v446 = vmax.f32 %v443, 0.0
    %v447 = vpack.c.bf16 %v446, %v446
    %v448 = vld [vmem:[%s7] sm:$0xf]
    %v449 = vld [vmem:[%s7 + $0x4] sm:$0xf]
    %v450 = vld [vmem:[%s7 + $0x8] sm:$0xf]
    %v451 = vld [vmem:[%s7 + $0xc] sm:$0xf]
    %v452 = vld [vmem:[%s7 + $0x10] sm:$0xf]
    %v453 = vld [vmem:[%s7 + $0x14] sm:$0xf]
    %v454 = vld [vmem:[%s7 + $0x18] sm:$0xf]
    %v455 = vld [vmem:[%s7 + $0x1c] sm:$0xf]
    %v456 = vld [vmem:[%s7 + $0x20] sm:$0xf]
    %v457 = vld [vmem:[%s7 + $0x24] sm:$0xf]
    %v458 = vld [vmem:[%s7 + $0x28] sm:$0xf]
    %v459 = vld [vmem:[%s7 + $0x2c] sm:$0xf]
    %v460 = vld [vmem:[%s7 + $0x30] sm:$0xf]
    %v461 = vld [vmem:[%s7 + $0x34] sm:$0xf]
    %v462 = vld [vmem:[%s7 + $0x38] sm:$0xf]
    %v463 = vld [vmem:[%s7 + $0x3c] sm:$0xf]
    %v464 = vld [vmem:[%s8] sm:$0x1]
    %v466 = vperm.slane %v464, 0
    %v484 = vunpack.c.l.b16 %v448
    %v485 = vunpack.c.l.b16 %v449
    %v486 = vunpack.c.l.b16 %v450
    %v487 = vunpack.c.l.b16 %v451
    %v488 = vunpack.c.l.b16 %v452
    %v489 = vunpack.c.l.b16 %v453
    %v490 = vunpack.c.l.b16 %v454
    %v491 = vunpack.c.l.b16 %v455
    %v492 = vunpack.c.l.b16 %v456
    %v493 = vunpack.c.l.b16 %v457
    %v494 = vunpack.c.l.b16 %v458
    %v495 = vunpack.c.l.b16 %v459
    %v496 = vunpack.c.l.b16 %v460
    %v497 = vunpack.c.l.b16 %v461
    %v498 = vunpack.c.l.b16 %v462
    %v499 = vunpack.c.l.b16 %v463
    %v500 = vpack.c.b16 %v485, %v484
    %v501 = vpack.c.b16 %v487, %v486
    %v502 = vpack.c.b16 %v489, %v488
    %v503 = vpack.c.b16 %v491, %v490
    %v504 = vpack.c.b16 %v493, %v492
    %v505 = vpack.c.b16 %v495, %v494
    %v506 = vpack.c.b16 %v497, %v496
    %v507 = vpack.c.b16 %v499, %v498
    %516 = vmatpush.bf16.msra.mxu0 %v507
    %517 = vmatpush.bf16.msra.mxu0 %v506
    %518 = vmatpush.bf16.msra.mxu0 %v505
    %519 = vmatpush.bf16.msra.mxu0 %v504
    %520 = vmatpush.bf16.msra.mxu0 %v503
    %521 = vmatpush.bf16.msra.mxu0 %v502
    %522 = vmatpush.bf16.msra.mxu0 %v501
    %523 = vmatpush.bf16.msra.mxu0 %v500
    %524 = vmatmul.bf16.gmra.mxu0 %v447
    %v525 = vpop.f32.mrf.mxu0
    %v526 = vadd.f32 %v466, %v525
    %v527 = vpop.f32.mrf.mxu0
    %528 = vdwg.mxu0
    %vm529 = vcmask 687104
    %530 = vst.msk [vmem:[#allocation7] sm:$0xff] %vm529, %v526
    // Predicated region
    $region46: #{decoder_forward.1} parent=1 // pred_check
      _
    $region47: #{decoder_forward.1} parent=1 // pred_check_branch
      %532 = sbr.rel (0) target = $region49
    $region48: #{decoder_forward.1} parent=1 // pred_region
      %534 = vsyncadd [#allocation4], 0
      %s536 = sshll.u32 [#allocation7], 4
      %s537 = int_to_ptr.vmem [resolvable:$true] %s536
      %s538 = sshll.u32 %s9, 4
      %s539 = int_to_ptr.hbm [resolvable:$true] %s538
      %541 = dma.vmem_to_hbm [thread:$0]  %s537, 128, %s539, [#allocation4]
    $region49: #{decoder_forward.1} parent=1 // pred_fallthru
      _
    // Predicated region
    $region50: #{decoder_forward.1} parent=1 // pred_check
      _
    $region51: #{decoder_forward.1} parent=1 // pred_check_branch
      %543 = sbr.rel (0) target = $region53
    $region52: #{decoder_forward.1} parent=1 // pred_region
      %545 = dma.done [#allocation4], 128
    $region53: #{decoder_forward.1} parent=1 // pred_fallthru
      _
    %546 = vsyncpa [#allocation3], 1
    %547 = vsyncpa [#allocation6], 1
    %548 = vsyncpa [#allocation4], 1

</llo_original>
